<compile_context>
chip_gen: v7x
topology: tpu7x:2x2x1
jax: 0.10.0
libtpu: 0.0.40
codegen_flags: <defaults>
</compile_context>

<pallas_src>
import functools

import jax
import jax.numpy as jnp
from jax.experimental import pallas as pl
from jax.experimental.pallas import tpu as pltpu

STATE_DIM = 16
HIDDEN = 32
ACT_DIM = 8
HEAD_COLS = 2 * ACT_DIM                       # fused mu|log_std head width
W_ROWS = STATE_DIM + 2 * HIDDEN               # packed weight slab rows
B_COLS = 2 * HIDDEN + HEAD_COLS               # packed bias row width

assert HEAD_COLS <= HIDDEN, "fused head must fit inside the packed slab width"
assert STATE_DIM % 8 == 0 and HIDDEN % 8 == 0, "slab slices must sit on sublane boundaries"


def _policy_kernel(x_ref, w_ref, b_ref, out_ref):
    x = x_ref[...]                                   # (tb, STATE_DIM)
    w = w_ref[...]                                   # (W_ROWS, HIDDEN)
    b = b_ref[...]                                   # (1, B_COLS)

    # Static sublane-aligned slices of the packed slabs (offsets are multiples of 8).
    w1 = w[0:STATE_DIM, :]                                             # (STATE_DIM, HIDDEN)
    w2 = w[STATE_DIM:STATE_DIM + HIDDEN, :]                            # (HIDDEN, HIDDEN)
    wh = w[STATE_DIM + HIDDEN:STATE_DIM + 2 * HIDDEN, 0:HEAD_COLS]     # (HIDDEN, 2*ACT_DIM)

    b1 = b[:, 0:HIDDEN]
    b2 = b[:, HIDDEN:2 * HIDDEN]
    bh = b[:, 2 * HIDDEN:2 * HIDDEN + HEAD_COLS]

    # MLP trunk (hidden_activation = relu).
    h = jnp.maximum(jnp.dot(x, w1, preferred_element_type=jnp.float32) + b1, 0.0)
    h = jnp.maximum(jnp.dot(h, w2, preferred_element_type=jnp.float32) + b2, 0.0)

    # Fused split heads: lanes [:ACT_DIM] = mu, lanes [ACT_DIM:] = log_std.
    head = jnp.dot(h, wh, preferred_element_type=jnp.float32) + bh     # (tb, 2*ACT_DIM)

    # clamp only the log_std lanes (output_activation = 'none', so mu passes through).
    col = jax.lax.broadcasted_iota(jnp.int32, head.shape, 1)
    out = jnp.where(col >= ACT_DIM, jnp.clip(head, -20.0, 2.0), head)
    out_ref[...] = out.astype(out_ref.dtype)


@functools.partial(jax.jit, static_argnames=("batch_tile",))
def cont_gaussian_policy_forward(states, w_slab, b_slab, *, batch_tile=128):
    """Returns (mu, log_std), matching ContGaussianPolicy.forward semantics."""
    B = states.shape[0]
    out_shape = jax.ShapeDtypeStruct((B, HEAD_COLS), jnp.float32)

    if B <= batch_tile:
        # Small batch: no grid, no pipeline — all operands whole in VMEM.
        vmem = pl.BlockSpec(memory_space=pltpu.MemorySpace.VMEM)
        out = pl.pallas_call(
            _policy_kernel,
            out_shape=out_shape,
            in_specs=[vmem, vmem, vmem],
            out_specs=vmem,
        )(states, w_slab, b_slab)
    else:
        # Large batch: tile over batch; weights/bias stay VMEM-resident across tiles.
        tb = batch_tile
        out = pl.pallas_call(
            _policy_kernel,
            out_shape=out_shape,
            grid=(pl.cdiv(B, tb),),
            in_specs=[
                pl.BlockSpec((tb, STATE_DIM), lambda i: (i, 0)),
                pl.BlockSpec((W_ROWS, HIDDEN), lambda i: (0, 0)),
                pl.BlockSpec((1, B_COLS), lambda i: (0, 0)),
            ],
            out_specs=pl.BlockSpec((tb, HEAD_COLS), lambda i: (i, 0)),
            compiler_params=pltpu.CompilerParams(
                dimension_semantics=("parallel",)),   # megacore split on v7x
        )(states, w_slab, b_slab)

    return out[:, :ACT_DIM], out[:, ACT_DIM:]


def init_params(key):
    """nn.Linear-style init: U(-1/sqrt(fan_in), 1/sqrt(fan_in)); W stored (in, out)."""
    def linear(k, fan_in, fan_out):
        k_w, k_b = jax.random.split(k)
        bound = 1.0 / jnp.sqrt(fan_in)
        w = jax.random.uniform(k_w, (fan_in, fan_out), jnp.float32, -bound, bound)
        b = jax.random.uniform(k_b, (1, fan_out), jnp.float32, -bound, bound)
        return w, b

    k1, k2, k3, k4 = jax.random.split(key, 4)
    w1, b1 = linear(k1, STATE_DIM, HIDDEN)
    w2, b2 = linear(k2, HIDDEN, HIDDEN)
    wl, bl = linear(k3, HIDDEN, ACT_DIM)   # mu head
    wr, br = linear(k4, HIDDEN, ACT_DIM)   # log_std head
    return (w1, b1, w2, b2, wl, bl, wr, br)


def pack_params(params):
    """Pack weights into one (W_ROWS, HIDDEN) slab and biases into one (1, B_COLS) row."""
    w1, b1, w2, b2, wl, bl, wr, br = params
    wh = jnp.concatenate([wl, wr], axis=1)                                # (HIDDEN, 2*ACT_DIM)
    wh = jnp.pad(wh, ((0, 0), (0, HIDDEN - HEAD_COLS)))                   # (HIDDEN, HIDDEN)
    w_slab = jnp.concatenate([w1, w2, wh], axis=0)                        # (W_ROWS, HIDDEN)
    b_slab = jnp.concatenate([b1, b2, bl, br], axis=1)                    # (1, B_COLS)
    return w_slab, b_slab


def reference_forward(states, params):
    w1, b1, w2, b2, wl, bl, wr, br = params
    h = jnp.maximum(states @ w1 + b1, 0.0)
    h = jnp.maximum(h @ w2 + b2, 0.0)
    mu = h @ wl + bl
    log_std = jnp.clip(h @ wr + br, -20.0, 2.0)
    return mu, log_std


if __name__ == "__main__":
    key = jax.random.PRNGKey(0)
    k_params, k_small, k_big = jax.random.split(key, 3)
    params = init_params(k_params)
    w_slab, b_slab = pack_params(params)

    # action_range (unused by forward(); kept for parity with the module __init__)
    action_low = -jnp.ones((ACT_DIM,), jnp.float32)
    action_high = jnp.ones((ACT_DIM,), jnp.float32)
    _action_scale = (action_high - action_low) / 2
    _action_bias = (action_high + action_low) / 2
    # TODO(synk): ContGaussianPolicy.sample (Normal rsample / tanh / log_prob) is not ported;
    # only forward() is implemented here.

    # --- small-batch path (no grid, all-VMEM) ---
    states_small = jax.random.normal(k_small, (8, STATE_DIM), jnp.float32)
    mu, log_std = cont_gaussian_policy_forward(states_small, w_slab, b_slab)
    mu = jax.block_until_ready(mu)
    log_std = jax.block_until_ready(log_std)
    mu_ref, log_std_ref = reference_forward(states_small, params)
    assert mu.shape == (8, ACT_DIM) and log_std.shape == (8, ACT_DIM)
    assert jnp.allclose(mu, mu_ref, atol=2e-5), "mu mismatch (small batch)"
    assert jnp.allclose(log_std, log_std_ref, atol=2e-5), "log_std mismatch (small batch)"

    # --- batch-tiled path (grid over batch, weights VMEM-resident, 'parallel' axis) ---
    states_big = jax.random.normal(k_big, (256, STATE_DIM), jnp.float32)
    mu_b, log_std_b = cont_gaussian_policy_forward(states_big, w_slab, b_slab,
                                                   batch_tile=128)
    mu_b = jax.block_until_ready(mu_b)
    log_std_b = jax.block_until_ready(log_std_b)
    mu_b_ref, log_std_b_ref = reference_forward(states_big, params)
    assert mu_b.shape == (256, ACT_DIM) and log_std_b.shape == (256, ACT_DIM)
    assert jnp.allclose(mu_b, mu_b_ref, atol=2e-5), "mu mismatch (tiled batch)"
    assert jnp.allclose(log_std_b, log_std_b_ref, atol=2e-5), "log_std mismatch (tiled batch)"

    print("KERNEL_OK")
</pallas_src>

<mosaic_0001>
module attributes {stable_mosaic.version = 11 : i64} {
  func.func @_policy_kernel(%arg0: memref<8x16xf32, #tpu.memory_space<vmem>>, %arg1: memref<80x32xf32, #tpu.memory_space<vmem>>, %arg2: memref<1x80xf32, #tpu.memory_space<vmem>>, %arg3: memref<8x16xf32, #tpu.memory_space<vmem>>) attributes {dimension_semantics = [], scalar_prefetch = 0 : i64, scratch_operands = 0 : i64, tpu.core_type = #tpu.core_type<tc>} {
    %c0 = arith.constant 0 : index
    %c0_0 = arith.constant 0 : index
    %0 = vector.load %arg0[%c0, %c0_0] : memref<8x16xf32, #tpu.memory_space<vmem>>, vector<8x16xf32>
    %c0_1 = arith.constant 0 : index
    %c0_2 = arith.constant 0 : index
    %1 = vector.load %arg1[%c0_1, %c0_2] : memref<80x32xf32, #tpu.memory_space<vmem>>, vector<80x32xf32>
    %c0_3 = arith.constant 0 : index
    %c0_4 = arith.constant 0 : index
    %2 = vector.load %arg2[%c0_3, %c0_4] : memref<1x80xf32, #tpu.memory_space<vmem>>, vector<1x80xf32>
    %3 = vector.extract_strided_slice %1 {offsets = [0, 0], sizes = [16, 32], strides = [1, 1]} : vector<80x32xf32> to vector<16x32xf32>
    %4 = vector.extract_strided_slice %1 {offsets = [16, 0], sizes = [32, 32], strides = [1, 1]} : vector<80x32xf32> to vector<32x32xf32>
    %5 = vector.extract_strided_slice %1 {offsets = [48, 0], sizes = [32, 16], strides = [1, 1]} : vector<80x32xf32> to vector<32x16xf32>
    %6 = vector.extract_strided_slice %2 {offsets = [0, 0], sizes = [1, 32], strides = [1, 1]} : vector<1x80xf32> to vector<1x32xf32>
    %7 = vector.extract_strided_slice %2 {offsets = [0, 32], sizes = [1, 32], strides = [1, 1]} : vector<1x80xf32> to vector<1x32xf32>
    %8 = vector.extract_strided_slice %2 {offsets = [0, 64], sizes = [1, 16], strides = [1, 1]} : vector<1x80xf32> to vector<1x16xf32>
    %cst = arith.constant dense<0.000000e+00> : vector<8x32xf32>
    %9 = tpu.matmul %0, %3, %cst {dimension_numbers = #tpu.dot_dimension_numbers<[1], [0], [0], [1], [0, 0, 1, 1], [], []>} : vector<8x16xf32>, vector<16x32xf32>, vector<8x32xf32> -> vector<8x32xf32>
    %10 = vector.broadcast %6 : vector<1x32xf32> to vector<8x32xf32>
    %11 = arith.addf %9, %10 : vector<8x32xf32>
    %cst_5 = arith.constant 0.000000e+00 : f32
    %12 = vector.broadcast %cst_5 : f32 to vector<8x32xf32>
    %13 = arith.maximumf %11, %12 : vector<8x32xf32>
    %cst_6 = arith.constant dense<0.000000e+00> : vector<8x32xf32>
    %14 = tpu.matmul %13, %4, %cst_6 {dimension_numbers = #tpu.dot_dimension_numbers<[1], [0], [0], [1], [0, 0, 1, 1], [], []>} : vector<8x32xf32>, vector<32x32xf32>, vector<8x32xf32> -> vector<8x32xf32>
    %15 = vector.broadcast %7 : vector<1x32xf32> to vector<8x32xf32>
    %16 = arith.addf %14, %15 : vector<8x32xf32>
    %cst_7 = arith.constant 0.000000e+00 : f32
    %17 = vector.broadcast %cst_7 : f32 to vector<8x32xf32>
    %18 = arith.maximumf %16, %17 : vector<8x32xf32>
    %cst_8 = arith.constant dense<0.000000e+00> : vector<8x16xf32>
    %19 = tpu.matmul %18, %5, %cst_8 {dimension_numbers = #tpu.dot_dimension_numbers<[1], [0], [0], [1], [0, 0, 1, 1], [], []>} : vector<8x32xf32>, vector<32x16xf32>, vector<8x16xf32> -> vector<8x16xf32>
    %20 = vector.broadcast %8 : vector<1x16xf32> to vector<8x16xf32>
    %21 = arith.addf %19, %20 : vector<8x16xf32>
    %22 = tpu.iota {dimensions = array<i32: 1>} : vector<8x16xi32>
    %c8_i32 = arith.constant 8 : i32
    %23 = vector.broadcast %c8_i32 : i32 to vector<8x16xi32>
    %24 = arith.cmpi sge, %22, %23 : vector<8x16xi32>
    %cst_9 = arith.constant -2.000000e+01 : f32
    %cst_10 = arith.constant 2.000000e+00 : f32
    %25 = vector.broadcast %cst_9 : f32 to vector<8x16xf32>
    %26 = arith.maximumf %25, %21 : vector<8x16xf32>
    %27 = vector.broadcast %cst_10 : f32 to vector<8x16xf32>
    %28 = arith.minimumf %27, %26 : vector<8x16xf32>
    %29 = arith.select %24, %28, %21 : vector<8x16xi1>, vector<8x16xf32>
    %c0_11 = arith.constant 0 : index
    %c0_12 = arith.constant 0 : index
    %30 = vector.load %arg3[%c0_11, %c0_12] : memref<8x16xf32, #tpu.memory_space<vmem>>, vector<8x16xf32>
    tpu.vector_store %arg3[%c0_11, %c0_12], %29 {strides = array<i32>} : memref<8x16xf32, #tpu.memory_space<vmem>>, vector<8x16xf32>,
    return
  }
}

</mosaic_0001>

<llo_original>
// kernel: cont_gaussian_policy_forward.1
$region0: #{cont_gaussian_policy_forward.1}
  #allocation0 [shape = 'u32[]', space=smem, size = 0x4, offset = 0x4, fixed_abs, tag = 'smem constant byte address 0x4 - core index']
  #allocation1 [shape = 'u32[144,128]{1,0:T(1,128)}', space=vmem, size = 0x12000, scoped, tag = 'internal scratch']
  %s0 = inlined_call_operand.vmem [shape: f32[8,16], index: 0, kind: input, shape index: {}]
  %s1 = inlined_call_operand.vmem [shape: f32[80,32], index: 1, kind: input, shape index: {}]
  %s2 = inlined_call_operand.vmem [shape: f32[1,80], index: 2, kind: input, shape index: {}]
  %s3 = inlined_call_operand.vmem [shape: f32[8,16], index: 3, kind: output, shape index: {}]
  %s4 = sld [smem:[#allocation0]]
  $region22: #{cont_gaussian_policy_forward.1} parent=0
    _
  %s6 = ssub.s32 1, %s4
  %s7 = scalar_select 0, %s6, %s4
  // Predicated region
  $region2: #{cont_gaussian_policy_forward.1} parent=0 // pred_check
    _
  $region3: #{cont_gaussian_policy_forward.1} parent=0 // pred_check_branch
    %9 = sbr.rel (0) target = $region5
  $region4: #{cont_gaussian_policy_forward.1} parent=0 // pred_region
    _
  $region5: #{cont_gaussian_policy_forward.1} parent=0 // pred_fallthru
    _
  // Predicated region
  $region6: #{cont_gaussian_policy_forward.1} parent=0 // pred_check
    _
  $region7: #{cont_gaussian_policy_forward.1} parent=0 // pred_check_branch
    %11 = sbr.rel (0) target = $region9
  $region8: #{cont_gaussian_policy_forward.1} parent=0 // pred_region
    _
  $region9: #{cont_gaussian_policy_forward.1} parent=0 // pred_fallthru
    _
  // Predicated region
  $region10: #{cont_gaussian_policy_forward.1} parent=0 // pred_check
    _
  $region11: #{cont_gaussian_policy_forward.1} parent=0 // pred_check_branch
    %13 = sbr.rel (0) target = $region13
  $region12: #{cont_gaussian_policy_forward.1} parent=0 // pred_region
    _
  $region13: #{cont_gaussian_policy_forward.1} parent=0 // pred_fallthru
    _
  %v14 = vld [vmem:[%s0] sm:$0xff]
  %v15 = vld [vmem:[%s1] sm:$0xff]
  %v16 = vld [vmem:[%s1 + $0x8] sm:$0xff]
  %v17 = vld [vmem:[%s1 + $0x10] sm:$0xff]
  %v18 = vld [vmem:[%s1 + $0x18] sm:$0xff]
  %v19 = vld [vmem:[%s1 + $0x20] sm:$0xff]
  %v20 = vld [vmem:[%s1 + $0x28] sm:$0xff]
  %v21 = vld [vmem:[%s1 + $0x30] sm:$0xff]
  %v22 = vld [vmem:[%s1 + $0x38] sm:$0xff]
  %v23 = vld [vmem:[%s1 + $0x40] sm:$0xff]
  %v24 = vld [vmem:[%s1 + $0x48] sm:$0xff]
  %v25 = vld [vmem:[%s2] sm:$0x1]
  %v27 = vlaneseq
  %v28 = vshrl.u32 %v27, 7
  %v29 = vsub.s32 0, %v28
  %v30 = vrot.slane %v25, %v29
  %vm32 = vcmask 130048
  %v34 = vsel %vm32, %v14, 0
  %36 = vmatprep.subr.mxu0 0.0
  %37 = vmatpush1.msra.mxu0 %v15
  %38 = vmatprep.subr.mxu0 0.0
  %39 = vmatpush1.msra.mxu0 %v16
  %40 = vmatprep.subr.mxu0 0.0
  %41 = vmatpush1.msra.mxu0 0.0
  %42 = vmatprep.subr.mxu0 0.0
  %43 = vmatpush1.msra.mxu0 0.0
  %44 = vmatprep.subr.mxu0 0.0
  %45 = vmatpush1.msra.mxu0 0.0
  %46 = vmatprep.subr.mxu0 0.0
  %47 = vmatpush1.msra.mxu0 0.0
  %48 = vmatprep.subr.mxu0 0.0
  %49 = vmatpush1.msra.mxu0 0.0
  %50 = vmatprep.subr.mxu0 0.0
  %51 = vmatpush1.msra.mxu0 0.0
  %52 = vmatprep.subr.mxu0 0.0
  %53 = vmatpush1.msra.mxu0 0.0
  %54 = vmatprep.subr.mxu0 0.0
  %55 = vmatpush1.msra.mxu0 0.0
  %56 = vmatprep.subr.mxu0 0.0
  %57 = vmatpush1.msra.mxu0 0.0
  %58 = vmatprep.subr.mxu0 0.0
  %59 = vmatpush1.msra.mxu0 0.0
  %60 = vmatprep.subr.mxu0 0.0
  %61 = vmatpush1.msra.mxu0 0.0
  %62 = vmatprep.subr.mxu0 0.0
  %63 = vmatpush1.msra.mxu0 0.0
  %64 = vmatprep.subr.mxu0 0.0
  %65 = vmatpush1.msra.mxu0 0.0
  %66 = vmatprep.subr.mxu0 0.0
  %67 = vmatpush1.msra.mxu0 0.0
  %68 = vmatprep.subr.mxu0 0.0
  %69 = vmatpush1.msra.mxu0 0.0
  %70 = vmatprep.subr.mxu0 0.0
  %71 = vmatpush1.msra.mxu0 0.0
  %72 = vmatprep.subr.mxu0 0.0
  %73 = vmatpush1.msra.mxu0 0.0
  %74 = vmatprep.subr.mxu0 0.0
  %75 = vmatpush1.msra.mxu0 0.0
  %76 = vmatprep.subr.mxu0 0.0
  %77 = vmatpush1.msra.mxu0 0.0
  %78 = vmatprep.subr.mxu0 0.0
  %79 = vmatpush1.msra.mxu0 0.0
  %80 = vmatprep.subr.mxu0 0.0
  %81 = vmatpush1.msra.mxu0 0.0
  %82 = vmatprep.subr.mxu0 0.0
  %83 = vmatpush1.msra.mxu0 0.0
  %84 = vmatprep.subr.mxu0 0.0
  %85 = vmatpush1.msra.mxu0 0.0
  %86 = vmatprep.subr.mxu0 0.0
  %87 = vmatpush1.msra.mxu0 0.0
  %88 = vmatprep.subr.mxu0 0.0
  %89 = vmatpush1.msra.mxu0 0.0
  %90 = vmatprep.subr.mxu0 0.0
  %91 = vmatpush1.msra.mxu0 0.0
  %92 = vmatprep.subr.mxu0 0.0
  %93 = vmatpush1.msra.mxu0 0.0
  %94 = vmatprep.subr.mxu0 0.0
  %95 = vmatpush1.msra.mxu0 0.0
  %96 = vmatprep.subr.mxu0 0.0
  %97 = vmatpush1.msra.mxu0 0.0
  %98 = vmatprep.subr.mxu0 0.0
  %99 = vmatpush1.msra.mxu0 0.0
  %100 = vmatprep.mubr.f32.mxu0 0.0
  %101 = vmatmul.mubr.f32.gmra.mrb[0].mxu0 %v34
  %v102 = vpop.f32.mrb[0].mxu0
  %v103 = vadd.f32 %v30, %v102
  %v104 = vpop.f32.mrb[0].mxu0
  %105 = vdwg.mxu0
  %v106 = vmax.f32 %v103, 0.0
  %107 = vrot.lane.b32.xlu0 %v30, 96
  %v108 = vpop.permute.xlu0 %107
  %vm110 = vcmask 261120
  %v112 = vsel %vm110, %v106, 0
  %114 = vmatprep.subr.mxu0 0.0
  %115 = vmatpush1.msra.mxu0 %v17
  %116 = vmatprep.subr.mxu0 0.0
  %117 = vmatpush1.msra.mxu0 %v18
  %118 = vmatprep.subr.mxu0 0.0
  %119 = vmatpush1.msra.mxu0 %v19
  %120 = vmatprep.subr.mxu0 0.0
  %121 = vmatpush1.msra.mxu0 %v20
  %122 = vmatprep.subr.mxu0 0.0
  %123 = vmatpush1.msra.mxu0 0.0
  %124 = vmatprep.subr.mxu0 0.0
  %125 = vmatpush1.msra.mxu0 0.0
  %126 = vmatprep.subr.mxu0 0.0
  %127 = vmatpush1.msra.mxu0 0.0
  %128 = vmatprep.subr.mxu0 0.0
  %129 = vmatpush1.msra.mxu0 0.0
  %130 = vmatprep.subr.mxu0 0.0
  %131 = vmatpush1.msra.mxu0 0.0
  %132 = vmatprep.subr.mxu0 0.0
  %133 = vmatpush1.msra.mxu0 0.0
  %134 = vmatprep.subr.mxu0 0.0
  %135 = vmatpush1.msra.mxu0 0.0
  %136 = vmatprep.subr.mxu0 0.0
  %137 = vmatpush1.msra.mxu0 0.0
  %138 = vmatprep.subr.mxu0 0.0
  %139 = vmatpush1.msra.mxu0 0.0
  %140 = vmatprep.subr.mxu0 0.0
  %141 = vmatpush1.msra.mxu0 0.0
  %142 = vmatprep.subr.mxu0 0.0
  %143 = vmatpush1.msra.mxu0 0.0
  %144 = vmatprep.subr.mxu0 0.0
  %145 = vmatpush1.msra.mxu0 0.0
  %146 = vmatprep.subr.mxu0 0.0
  %147 = vmatpush1.msra.mxu0 0.0
  %148 = vmatprep.subr.mxu0 0.0
  %149 = vmatpush1.msra.mxu0 0.0
  %150 = vmatprep.subr.mxu0 0.0
  %151 = vmatpush1.msra.mxu0 0.0
  %152 = vmatprep.subr.mxu0 0.0
  %153 = vmatpush1.msra.mxu0 0.0
  %154 = vmatprep.subr.mxu0 0.0
  %155 = vmatpush1.msra.mxu0 0.0
  %156 = vmatprep.subr.mxu0 0.0
  %157 = vmatpush1.msra.mxu0 0.0
  %158 = vmatprep.subr.mxu0 0.0
  %159 = vmatpush1.msra.mxu0 0.0
  %160 = vmatprep.subr.mxu0 0.0
  %161 = vmatpush1.msra.mxu0 0.0
  %162 = vmatprep.subr.mxu0 0.0
  %163 = vmatpush1.msra.mxu0 0.0
  %164 = vmatprep.subr.mxu0 0.0
  %165 = vmatpush1.msra.mxu0 0.0
  %166 = vmatprep.subr.mxu0 0.0
  %167 = vmatpush1.msra.mxu0 0.0
  %168 = vmatprep.subr.mxu0 0.0
  %169 = vmatpush1.msra.mxu0 0.0
  %170 = vmatprep.subr.mxu0 0.0
  %171 = vmatpush1.msra.mxu0 0.0
  %172 = vmatprep.subr.mxu0 0.0
  %173 = vmatpush1.msra.mxu0 0.0
  %174 = vmatprep.subr.mxu0 0.0
  %175 = vmatpush1.msra.mxu0 0.0
  %176 = vmatprep.subr.mxu0 0.0
  %177 = vmatpush1.msra.mxu0 0.0
  %178 = vmatprep.mubr.f32.mxu0 0.0
  %179 = vmatmul.mubr.f32.gmra.mrb[0].mxu0 %v112
  %v180 = vpop.f32.mrb[0].mxu0
  %v181 = vadd.f32 %v108, %v180
  %v182 = vpop.f32.mrb[0].mxu0
  %183 = vdwg.mxu0
  %v184 = vmax.f32 %v181, 0.0
  %185 = vrot.lane.b32.xlu0 %v30, 64
  %v186 = vpop.permute.xlu0 %185
  %v189 = vsel %vm110, %v184, 0
  %191 = vmatprep.subr.mxu0 0.0
  %192 = vmatpush1.msra.mxu0 %v21
  %193 = vmatprep.subr.mxu0 0.0
  %194 = vmatpush1.msra.mxu0 %v22
  %195 = vmatprep.subr.mxu0 0.0
  %196 = vmatpush1.msra.mxu0 %v23
  %197 = vmatprep.subr.mxu0 0.0
  %198 = vmatpush1.msra.mxu0 %v24
  %199 = vmatprep.subr.mxu0 0.0
  %200 = vmatpush1.msra.mxu0 0.0
  %201 = vmatprep.subr.mxu0 0.0
  %202 = vmatpush1.msra.mxu0 0.0
  %203 = vmatprep.subr.mxu0 0.0
  %204 = vmatpush1.msra.mxu0 0.0
  %205 = vmatprep.subr.mxu0 0.0
  %206 = vmatpush1.msra.mxu0 0.0
  %207 = vmatprep.subr.mxu0 0.0
  %208 = vmatpush1.msra.mxu0 0.0
  %209 = vmatprep.subr.mxu0 0.0
  %210 = vmatpush1.msra.mxu0 0.0
  %211 = vmatprep.subr.mxu0 0.0
  %212 = vmatpush1.msra.mxu0 0.0
  %213 = vmatprep.subr.mxu0 0.0
  %214 = vmatpush1.msra.mxu0 0.0
  %215 = vmatprep.subr.mxu0 0.0
  %216 = vmatpush1.msra.mxu0 0.0
  %217 = vmatprep.subr.mxu0 0.0
  %218 = vmatpush1.msra.mxu0 0.0
  %219 = vmatprep.subr.mxu0 0.0
  %220 = vmatpush1.msra.mxu0 0.0
  %221 = vmatprep.subr.mxu0 0.0
  %222 = vmatpush1.msra.mxu0 0.0
  %223 = vmatprep.subr.mxu0 0.0
  %224 = vmatpush1.msra.mxu0 0.0
  %225 = vmatprep.subr.mxu0 0.0
  %226 = vmatpush1.msra.mxu0 0.0
  %227 = vmatprep.subr.mxu0 0.0
  %228 = vmatpush1.msra.mxu0 0.0
  %229 = vmatprep.subr.mxu0 0.0
  %230 = vmatpush1.msra.mxu0 0.0
  %231 = vmatprep.subr.mxu0 0.0
  %232 = vmatpush1.msra.mxu0 0.0
  %233 = vmatprep.subr.mxu0 0.0
  %234 = vmatpush1.msra.mxu0 0.0
  %235 = vmatprep.subr.mxu0 0.0
  %236 = vmatpush1.msra.mxu0 0.0
  %237 = vmatprep.subr.mxu0 0.0
  %238 = vmatpush1.msra.mxu0 0.0
  %239 = vmatprep.subr.mxu0 0.0
  %240 = vmatpush1.msra.mxu0 0.0
  %241 = vmatprep.subr.mxu0 0.0
  %242 = vmatpush1.msra.mxu0 0.0
  %243 = vmatprep.subr.mxu0 0.0
  %244 = vmatpush1.msra.mxu0 0.0
  %245 = vmatprep.subr.mxu0 0.0
  %246 = vmatpush1.msra.mxu0 0.0
  %247 = vmatprep.subr.mxu0 0.0
  %248 = vmatpush1.msra.mxu0 0.0
  %249 = vmatprep.subr.mxu0 0.0
  %250 = vmatpush1.msra.mxu0 0.0
  %251 = vmatprep.subr.mxu0 0.0
  %252 = vmatpush1.msra.mxu0 0.0
  %253 = vmatprep.subr.mxu0 0.0
  %254 = vmatpush1.msra.mxu0 0.0
  %255 = vmatprep.mubr.f32.mxu0 0.0
  %256 = vmatmul.mubr.f32.gmra.mrb[0].mxu0 %v189
  %v257 = vpop.f32.mrb[0].mxu0
  %v258 = vadd.f32 %v186, %v257
  %v259 = vpop.f32.mrb[0].mxu0
  %260 = vdwg.mxu0
  %v261 = vlaneseq
  %v262 = vand.u32 %v261, 127
  %vm263 = vcmp.ge.s32.totalorder %v262, 8
  %v264 = vmax.f32 %v258, -20.0
  %v265 = vmin.f32 %v264, 2.0
  %v266 = vsel %vm263, %v265, %v258
  %267 = vst.msk [vmem:[%s3] sm:$0xff] %vm32, %v266
  // Predicated region
  $region14: #{cont_gaussian_policy_forward.1} parent=0 // pred_check
    _
  $region15: #{cont_gaussian_policy_forward.1} parent=0 // pred_check_branch
    %269 = sbr.rel (0) target = $region17
  $region16: #{cont_gaussian_policy_forward.1} parent=0 // pred_region
    _
  $region17: #{cont_gaussian_policy_forward.1} parent=0 // pred_fallthru
    _
  // Predicated region
  $region18: #{cont_gaussian_policy_forward.1} parent=0 // pred_check
    _
  $region19: #{cont_gaussian_policy_forward.1} parent=0 // pred_check_branch
    %271 = sbr.rel (0) target = $region21
  $region20: #{cont_gaussian_policy_forward.1} parent=0 // pred_region
    _
  $region21: #{cont_gaussian_policy_forward.1} parent=0 // pred_fallthru
    _

</llo_original>
